<compile_context>
chip_gen: v6e
topology: v6e:2x2x1
jax: 0.10.0
libtpu: 0.0.40
codegen_flags: <defaults>
</compile_context>

<pallas_src>
import functools
import math

import jax
import jax.numpy as jnp
from jax.experimental import pallas as pl
from jax.experimental.pallas import tpu as pltpu

_VMEM_LIMIT = 64 * 1024 * 1024  # fits v7x (64 MiB/TC); plenty of headroom on v5e/v6e


# ----------------------------- helpers ---------------------------------------
def _pick_tile(dim, mult, max_tile):
    """Largest multiple of `mult` <= max_tile that divides `dim`, else the full dim."""
    if dim % mult != 0:
        return dim
    t = min(max_tile, dim)
    t -= t % mult
    while t >= mult:
        if dim % t == 0:
            return t
        t -= mult
    return dim


def _gelu(x):
    # tanh-approximate GELU (lowers to the EUP tanh unit).
    # TODO(synk): HF BERT's default "gelu" is the exact erf form; diff < ~1e-3.
    c = math.sqrt(2.0 / math.pi)
    return 0.5 * x * (1.0 + jnp.tanh(c * (x + 0.044715 * x * x * x)))


# ----------------------------- dense (Linear) kernels -------------------------
def _dense_kernel(x_ref, w_ref, b_ref, o_ref, *, activation):
    # Operands stay in native dtype (bf16 full-rate MXU); f32 accumulation only.
    y = jnp.dot(x_ref[...], w_ref[...], preferred_element_type=jnp.float32)
    y = y + b_ref[...].astype(jnp.float32)  # bias fused in epilogue
    if activation == "gelu":
        y = _gelu(y)
    o_ref[...] = y.astype(o_ref.dtype)


def _dense_acc_kernel(x_ref, w_ref, b_ref, o_ref, acc_ref, *, activation):
    k = pl.program_id(2)

    @pl.when(k == 0)
    def _():
        acc_ref[...] = jnp.zeros_like(acc_ref)

    acc_ref[...] += jnp.dot(x_ref[...], w_ref[...], preferred_element_type=jnp.float32)

    @pl.when(k == pl.num_programs(2) - 1)
    def _():
        y = acc_ref[...] + b_ref[...].astype(jnp.float32)
        if activation == "gelu":
            y = _gelu(y)
        o_ref[...] = y.astype(o_ref.dtype)


def dense(x, w, b, *, activation=None, max_rows=512, max_cols=1024, max_k=1024):
    """y = x @ w + b (w stored [in, out] == nn.Linear.weight.T), optional fused GELU."""
    M, K = x.shape
    Kw, N = w.shape
    assert K == Kw
    tm = _pick_tile(M, 8, max_rows)
    tn = _pick_tile(N, 128, max_cols)
    tk = _pick_tile(K, 128, max_k)
    b2 = b.reshape(1, N)
    itemsize = jnp.dtype(x.dtype).itemsize
    cost = pl.CostEstimate(
        flops=2 * M * N * K,
        transcendentals=M * N if activation == "gelu" else 0,
        bytes_accessed=(M * K + K * N + N + M * N) * itemsize,
    )

    if tk == K:
        # Single contraction tile: no K grid axis, no accumulator, direct epilogue.
        return pl.pallas_call(
            functools.partial(_dense_kernel, activation=activation),
            out_shape=jax.ShapeDtypeStruct((M, N), x.dtype),
            grid_spec=pltpu.PrefetchScalarGridSpec(
                num_scalar_prefetch=0,
                grid=(M // tm, N // tn),
                in_specs=[
                    pl.BlockSpec((tm, K), lambda i, j: (i, 0)),
                    pl.BlockSpec((K, tn), lambda i, j: (0, j)),
                    pl.BlockSpec((1, tn), lambda i, j: (0, j)),
                ],
                out_specs=pl.BlockSpec((tm, tn), lambda i, j: (i, j)),
            ),
            compiler_params=pltpu.CompilerParams(
                dimension_semantics=("parallel", "parallel"),
                vmem_limit_bytes=_VMEM_LIMIT,
            ),
            cost_estimate=cost,
        )(x, w, b2)

    return pl.pallas_call(
        functools.partial(_dense_acc_kernel, activation=activation),
        out_shape=jax.ShapeDtypeStruct((M, N), x.dtype),
        grid_spec=pltpu.PrefetchScalarGridSpec(
            num_scalar_prefetch=0,
            grid=(M // tm, N // tn, K // tk),
            in_specs=[
                pl.BlockSpec((tm, tk), lambda i, j, k: (i, k)),
                pl.BlockSpec((tk, tn), lambda i, j, k: (k, j)),
                pl.BlockSpec((1, tn), lambda i, j, k: (0, j)),
            ],
            out_specs=pl.BlockSpec((tm, tn), lambda i, j, k: (i, j)),
            scratch_shapes=[pltpu.VMEM((tm, tn), jnp.float32)],
        ),
        compiler_params=pltpu.CompilerParams(
            dimension_semantics=("parallel", "parallel", "arbitrary"),
            vmem_limit_bytes=_VMEM_LIMIT,
        ),
        cost_estimate=cost,
    )(x, w, b2)


# ------------------- dense + residual-add + LayerNorm (fused) -----------------
def _ln_epilogue(y, g_ref, bb_ref, o_ref, eps):
    mean = jnp.mean(y, axis=-1, keepdims=True)
    c = y - mean
    var = jnp.mean(c * c, axis=-1, keepdims=True)
    scale = jax.lax.rsqrt(var + eps) * g_ref[...].astype(jnp.float32)  # fold gamma
    o_ref[...] = (c * scale + bb_ref[...].astype(jnp.float32)).astype(o_ref.dtype)


def _dense_add_ln_kernel(x_ref, w_ref, b_ref, r_ref, g_ref, bb_ref, o_ref, *, eps):
    y = jnp.dot(x_ref[...], w_ref[...], preferred_element_type=jnp.float32)
    y = y + b_ref[...].astype(jnp.float32) + r_ref[...].astype(jnp.float32)
    _ln_epilogue(y, g_ref, bb_ref, o_ref, eps)
    # Dropout before the residual add: identity in inference mode.


def _dense_add_ln_acc_kernel(x_ref, w_ref, b_ref, r_ref, g_ref, bb_ref, o_ref,
                             acc_ref, *, eps):
    k = pl.program_id(1)

    @pl.when(k == 0)
    def _():
        acc_ref[...] = jnp.zeros_like(acc_ref)

    acc_ref[...] += jnp.dot(x_ref[...], w_ref[...], preferred_element_type=jnp.float32)

    @pl.when(k == pl.num_programs(1) - 1)
    def _():
        y = acc_ref[...] + b_ref[...].astype(jnp.float32) + r_ref[...].astype(jnp.float32)
        _ln_epilogue(y, g_ref, bb_ref, o_ref, eps)


def dense_add_ln(x, w, b, residual, gamma, beta, *, eps=1e-12,
                 max_rows=256, max_k=1024):
    """LayerNorm((x @ w + b) + residual).  Full N per block so LN runs in the epilogue."""
    M, K = x.shape
    Kw, N = w.shape
    assert K == Kw and residual.shape == (M, N)
    tm = _pick_tile(M, 8, max_rows)
    tk = _pick_tile(K, 128, max_k)
    b2, g2, bb2 = b.reshape(1, N), gamma.reshape(1, N), beta.reshape(1, N)
    itemsize = jnp.dtype(x.dtype).itemsize
    cost = pl.CostEstimate(
        flops=2 * M * N * K + 10 * M * N,
        transcendentals=0,
        bytes_accessed=(M * K + K * N + 2 * M * N + 3 * N) * itemsize,
    )

    if tk == K:
        return pl.pallas_call(
            functools.partial(_dense_add_ln_kernel, eps=eps),
            out_shape=jax.ShapeDtypeStruct((M, N), x.dtype),
            grid_spec=pltpu.PrefetchScalarGridSpec(
                num_scalar_prefetch=0,
                grid=(M // tm,),
                in_specs=[
                    pl.BlockSpec((tm, K), lambda i: (i, 0)),
                    pl.BlockSpec((K, N), lambda i: (0, 0)),
                    pl.BlockSpec((1, N), lambda i: (0, 0)),
                    pl.BlockSpec((tm, N), lambda i: (i, 0)),
                    pl.BlockSpec((1, N), lambda i: (0, 0)),
                    pl.BlockSpec((1, N), lambda i: (0, 0)),
                ],
                out_specs=pl.BlockSpec((tm, N), lambda i: (i, 0)),
            ),
            compiler_params=pltpu.CompilerParams(
                dimension_semantics=("parallel",),
                vmem_limit_bytes=_VMEM_LIMIT,
            ),
            cost_estimate=cost,
        )(x, w, b2, residual, g2, bb2)

    return pl.pallas_call(
        functools.partial(_dense_add_ln_acc_kernel, eps=eps),
        out_shape=jax.ShapeDtypeStruct((M, N), x.dtype),
        grid_spec=pltpu.PrefetchScalarGridSpec(
            num_scalar_prefetch=0,
            grid=(M // tm, K // tk),
            in_specs=[
                pl.BlockSpec((tm, tk), lambda i, k: (i, k)),
                pl.BlockSpec((tk, N), lambda i, k: (k, 0)),
                pl.BlockSpec((1, N), lambda i, k: (0, 0)),
                pl.BlockSpec((tm, N), lambda i, k: (i, 0)),
                pl.BlockSpec((1, N), lambda i, k: (0, 0)),
                pl.BlockSpec((1, N), lambda i, k: (0, 0)),
            ],
            out_specs=pl.BlockSpec((tm, N), lambda i, k: (i, 0)),
            scratch_shapes=[pltpu.VMEM((tm, N), jnp.float32)],
        ),
        compiler_params=pltpu.CompilerParams(
            dimension_semantics=("parallel", "arbitrary"),
            vmem_limit_bytes=_VMEM_LIMIT,
        ),
        cost_estimate=cost,
    )(x, w, b2, residual, g2, bb2)


# ----------------------------- multi-head self-attention ----------------------
def _attn_block(q_ref, k_ref, v_ref, m_ref, o_ref, heads, head_dim, scale):
    outs = []
    for h in range(heads):
        sl = slice(h * head_dim, (h + 1) * head_dim)
        q = q_ref[:, sl]
        q = q * jnp.asarray(scale, dtype=q.dtype)   # scale (S,Dh), not (S,S) scores
        k = k_ref[:, sl]
        v = v_ref[:, sl]
        # Contract last dims of both operands directly: no in-kernel K transpose.
        s = jax.lax.dot_general(q, k, (((1,), (1,)), ((), ())),
                                preferred_element_type=jnp.float32)
        if m_ref is not None:
            s = s + m_ref[...].astype(jnp.float32)  # (1,S)/(S,S) broadcast add
        s = s - jnp.max(s, axis=-1, keepdims=True)
        p = jnp.exp(s)
        inv = pl.reciprocal(jnp.sum(p, axis=-1, keepdims=True), approx=True)
        p = (p * inv).astype(v.dtype)               # bf16 PV matmul when v is bf16
        # attention-probs dropout: identity in inference mode.
        outs.append(jax.lax.dot_general(p, v, (((1,), (0,)), ((), ())),
                                        preferred_element_type=jnp.float32))
    ctx = outs[0] if len(outs) == 1 else jnp.concatenate(outs, axis=-1)
    o_ref[...] = ctx.astype(o_ref.dtype)            # single lane-dense store


def _attn_kernel(q_ref, k_ref, v_ref, o_ref, *, heads, head_dim, scale):
    _attn_block(q_ref, k_ref, v_ref, None, o_ref, heads, head_dim, scale)


def _attn_kernel_masked(q_ref, k_ref, v_ref, m_ref, o_ref, *, heads, head_dim, scale):
    _attn_block(q_ref, k_ref, v_ref, m_ref, o_ref, heads, head_dim, scale)


def multi_head_attention(qkv, num_heads, hidden, attention_mask=None):
    """qkv: [S, 3*hidden] fused Q/K/V projection output. Returns context [S, hidden]."""
    S, three_h = qkv.shape
    assert three_h == 3 * hidden
    head_dim = hidden // num_heads
    scale = 1.0 / math.sqrt(head_dim)

    # Heads per grid step: smallest group whose lane width is a multiple of 128.
    group = num_heads
    for g in range(1, num_heads + 1):
        if num_heads % g == 0 and (g * head_dim) % 128 == 0:
            group = g
            break
    blk = group * head_dim
    n_groups = num_heads // group

    if blk % 128 == 0:
        # Read q/k/v directly out of the [S, 3H] qkv array: no slices, no transposes.
        nsec = hidden // blk
        in_specs = [
            pl.BlockSpec((S, blk), lambda g: (0, g)),
            pl.BlockSpec((S, blk), lambda g: (0, nsec + g)),
            pl.BlockSpec((S, blk), lambda g: (0, 2 * nsec + g)),
        ]
        args = (qkv, qkv, qkv)
    else:
        # Tiny-head fallback (unit-test sizes): one full-H block per tensor.
        in_specs = [
            pl.BlockSpec((S, blk), lambda g: (0, g)),
            pl.BlockSpec((S, blk), lambda g: (0, g)),
            pl.BlockSpec((S, blk), lambda g: (0, g)),
        ]
        args = (qkv[:, :hidden], qkv[:, hidden:2 * hidden], qkv[:, 2 * hidden:])

    if attention_mask is None:
        kernel = functools.partial(_attn_kernel, heads=group, head_dim=head_dim,
                                   scale=scale)
    else:
        m = jnp.squeeze(jnp.asarray(attention_mask, jnp.float32))
        if m.ndim <= 1:
            m = m.reshape(1, S)   # keep (1,S); broadcast over query rows in-kernel
        # TODO(synk): batched HF extended masks (B,1,1,S) with B>1 are not supported.
        in_specs = in_specs + [pl.BlockSpec(m.shape, lambda g: (0, 0))]
        args = args + (m,)
        kernel = functools.partial(_attn_kernel_masked, heads=group,
                                   head_dim=head_dim, scale=scale)

    return pl.pallas_call(
        kernel,
        out_shape=jax.ShapeDtypeStruct((S, hidden), qkv.dtype),
        grid_spec=pltpu.PrefetchScalarGridSpec(
            num_scalar_prefetch=0,
            grid=(n_groups,),
            in_specs=in_specs,
            out_specs=pl.BlockSpec((S, blk), lambda g: (0, g)),
        ),
        compiler_params=pltpu.CompilerParams(
            dimension_semantics=("parallel",),
            vmem_limit_bytes=_VMEM_LIMIT,
        ),
    )(*args)


# ----------------------------- encoder forward --------------------------------
def bert_encoder_for_tsp(hidden_states, layer_params, *, num_heads,
                         attention_mask=None, layer_norm_eps=1e-12):
    """hidden_states: [seq, hidden] (seq_len_dim=0, no batch dim — as in the module)."""
    x = hidden_states
    H = x.shape[-1]
    for p in layer_params:
        qkv = dense(x, p["w_qkv"], p["b_qkv"])                       # fused Q/K/V proj
        ctx = multi_head_attention(qkv, num_heads, H, attention_mask)
        x = dense_add_ln(ctx, p["w_attn_out"], p["b_attn_out"],      # proj + add + LN
                         x, p["ln1_g"], p["ln1_b"], eps=layer_norm_eps)
        inter = dense(x, p["w_inter"], p["b_inter"], activation="gelu")
        x = dense_add_ln(inter, p["w_ffn_out"], p["b_ffn_out"],      # proj + add + LN
                         x, p["ln2_g"], p["ln2_b"], eps=layer_norm_eps)
    return x


# ----------------------------- reference (pure JAX) ----------------------------
def _reference_encoder(hidden_states, layer_params, *, num_heads,
                       attention_mask=None, eps=1e-12):
    def ln(v, g, b):
        m = jnp.mean(v, -1, keepdims=True)
        c = v - m
        var = jnp.mean(c * c, -1, keepdims=True)
        return c * jax.lax.rsqrt(var + eps) * g + b

    x = hidden_states.astype(jnp.float32)
    S, H = x.shape
    Dh = H // num_heads
    for p in layer_params:
        pf = {k: jnp.asarray(v, jnp.float32) for k, v in p.items()}
        qkv = x @ pf["w_qkv"] + pf["b_qkv"]
        q, k, v = qkv[:, :H], qkv[:, H:2 * H], qkv[:, 2 * H:]
        qh = q.reshape(S, num_heads, Dh).transpose(1, 0, 2)
        kh = k.reshape(S, num_heads, Dh).transpose(1, 0, 2)
        vh = v.reshape(S, num_heads, Dh).transpose(1, 0, 2)
        s = jnp.einsum("hqd,hkd->hqk", qh, kh) / math.sqrt(Dh)
        if attention_mask is not None:
            m = jnp.squeeze(jnp.asarray(attention_mask, jnp.float32))
            if m.ndim <= 1:
                m = m.reshape(1, S)
            s = s + m
        probs = jax.nn.softmax(s, axis=-1)
        ctx = jnp.einsum("hqk,hkd->hqd", probs, vh).transpose(1, 0, 2).reshape(S, H)
        attn_out = ctx @ pf["w_attn_out"] + pf["b_attn_out"]
        x = ln(attn_out + x, pf["ln1_g"], pf["ln1_b"])
        inter = _gelu(x @ pf["w_inter"] + pf["b_inter"])
        ff = inter @ pf["w_ffn_out"] + pf["b_ffn_out"]
        x = ln(ff + x, pf["ln2_g"], pf["ln2_b"])
    return x.astype(hidden_states.dtype)


if __name__ == "__main__":
    # Small config-equivalent shapes.
    num_hidden_layers = 2
    hidden = 32            # config.hidden_size
    num_heads = 4          # config.num_attention_heads -> head size 8
    intermediate = 128     # config.intermediate_size
    seq = 8

    key = jax.random.PRNGKey(0)

    def make_layer(k):
        ks = jax.random.split(k, 8)
        init = lambda kk, shape: jax.random.normal(kk, shape, jnp.float32) * 0.02
        return {
            # weights stored as [in, out] == nn.Linear.weight.T
            "w_qkv": init(ks[0], (hidden, 3 * hidden)),
            "b_qkv": init(ks[1], (3 * hidden,)),
            "w_attn_out": init(ks[2], (hidden, hidden)),
            "b_attn_out": init(ks[3], (hidden,)),
            "ln1_g": jnp.ones((hidden,), jnp.float32),
            "ln1_b": jnp.zeros((hidden,), jnp.float32),
            "w_inter": init(ks[4], (hidden, intermediate)),
            "b_inter": init(ks[5], (intermediate,)),
            "w_ffn_out": init(ks[6], (intermediate, hidden)),
            "b_ffn_out": init(ks[7], (hidden,)),
            "ln2_g": jnp.ones((hidden,), jnp.float32),
            "ln2_b": jnp.zeros((hidden,), jnp.float32),
        }

    key, *layer_keys = jax.random.split(key, num_hidden_layers + 1)
    layers = [make_layer(k) for k in layer_keys]

    key, k_in = jax.random.split(key)
    hidden_states = jax.random.normal(k_in, (seq, hidden), jnp.float32)

    # --- unmasked, f32 (accuracy check) ---
    out = bert_encoder_for_tsp(hidden_states, layers, num_heads=num_heads)
    out = jax.block_until_ready(out)
    ref = _reference_encoder(hidden_states, layers, num_heads=num_heads)
    assert out.shape == (seq, hidden)
    assert jnp.allclose(out, ref, atol=2e-2, rtol=2e-2), (
        f"mismatch vs reference: max abs diff {jnp.max(jnp.abs(out - ref))}"
    )

    # --- masked (HF-style additive mask: 0 keep / -1e4 drop), f32 ---
    mask = jnp.where(jnp.arange(seq) < seq - 2, 0.0, -1.0e4).astype(jnp.float32)
    out_m = bert_encoder_for_tsp(hidden_states, layers, num_heads=num_heads,
                                 attention_mask=mask)
    out_m = jax.block_until_ready(out_m)
    ref_m = _reference_encoder(hidden_states, layers, num_heads=num_heads,
                               attention_mask=mask)
    assert jnp.allclose(out_m, ref_m, atol=2e-2, rtol=2e-2), (
        f"masked mismatch: max abs diff {jnp.max(jnp.abs(out_m - ref_m))}"
    )

    # --- bf16 path (full-rate MXU operands): smoke check ---
    layers_bf16 = jax.tree_util.tree_map(lambda a: a.astype(jnp.bfloat16), layers)
    out_bf16 = bert_encoder_for_tsp(hidden_states.astype(jnp.bfloat16), layers_bf16,
                                    num_heads=num_heads)
    out_bf16 = jax.block_until_ready(out_bf16)
    assert out_bf16.shape == (seq, hidden)
    assert bool(jnp.all(jnp.isfinite(out_bf16.astype(jnp.float32))))

    print("KERNEL_OK")
</pallas_src>

<mosaic_0001>
module attributes {stable_mosaic.version = 11 : i64} {
  func.func @_dense_kernel(%arg0: i32, %arg1: i32, %arg2: memref<8x32xf32, #tpu.memory_space<vmem>>, %arg3: memref<32x96xf32, #tpu.memory_space<vmem>>, %arg4: memref<1x96xf32, #tpu.memory_space<vmem>>, %arg5: memref<8x96xf32, #tpu.memory_space<vmem>>) attributes {dimension_semantics = [#tpu.dimension_semantics<parallel>, #tpu.dimension_semantics<parallel>], iteration_bounds = array<i64: 1, 1>, scalar_prefetch = 0 : i64, scratch_operands = 0 : i64, tpu.core_type = #tpu.core_type<tc>, window_params = [{transform_indices = @transform_0, window_bounds = array<i64: 8, 32>}, {transform_indices = @transform_1, window_bounds = array<i64: 32, 96>}, {transform_indices = @transform_2, window_bounds = array<i64: 1, 96>}, {transform_indices = @transform_3, window_bounds = array<i64: 8, 96>}]} {
    %c0 = arith.constant 0 : index
    %c0_0 = arith.constant 0 : index
    %0 = vector.load %arg2[%c0, %c0_0] : memref<8x32xf32, #tpu.memory_space<vmem>>, vector<8x32xf32>
    %c0_1 = arith.constant 0 : index
    %c0_2 = arith.constant 0 : index
    %1 = vector.load %arg3[%c0_1, %c0_2] : memref<32x96xf32, #tpu.memory_space<vmem>>, vector<32x96xf32>
    %cst = arith.constant dense<0.000000e+00> : vector<8x96xf32>
    %2 = tpu.matmul %0, %1, %cst {dimension_numbers = #tpu.dot_dimension_numbers<[1], [0], [0], [1], [0, 0, 1, 1], [], []>} : vector<8x32xf32>, vector<32x96xf32>, vector<8x96xf32> -> vector<8x96xf32>
    %c0_3 = arith.constant 0 : index
    %c0_4 = arith.constant 0 : index
    %3 = vector.load %arg4[%c0_3, %c0_4] : memref<1x96xf32, #tpu.memory_space<vmem>>, vector<1x96xf32>
    %4 = vector.broadcast %3 : vector<1x96xf32> to vector<8x96xf32>
    %5 = arith.addf %2, %4 : vector<8x96xf32>
    %c0_5 = arith.constant 0 : index
    %c0_6 = arith.constant 0 : index
    %6 = vector.load %arg5[%c0_5, %c0_6] : memref<8x96xf32, #tpu.memory_space<vmem>>, vector<8x96xf32>
    tpu.vector_store %arg5[%c0_5, %c0_6], %5 {strides = array<i32>} : memref<8x96xf32, #tpu.memory_space<vmem>>, vector<8x96xf32>,
    return
  }
  func.func @transform_0(%arg0: i32, %arg1: i32) -> (i32, i32) {
    %c0_i32 = arith.constant 0 : i32
    %c0_i32_0 = arith.constant 0 : i32
    return %arg0, %c0_i32 : i32, i32
  }
  func.func @transform_1(%arg0: i32, %arg1: i32) -> (i32, i32) {
    %c0_i32 = arith.constant 0 : i32
    %c0_i32_0 = arith.constant 0 : i32
    return %c0_i32, %arg1 : i32, i32
  }
  func.func @transform_2(%arg0: i32, %arg1: i32) -> (i32, i32) {
    %c0_i32 = arith.constant 0 : i32
    %c0_i32_0 = arith.constant 0 : i32
    return %c0_i32, %arg1 : i32, i32
  }
  func.func @transform_3(%arg0: i32, %arg1: i32) -> (i32, i32) {
    %c0_i32 = arith.constant 0 : i32
    return %arg0, %arg1 : i32, i32
  }
}

</mosaic_0001>

<llo_original>
// kernel: tpu_custom_call.1
$region0: #{tpu_custom_call.1}
  #allocation0 [shape = 'u32[]', space=smem, size = 0x4, offset = 0x4, fixed_abs, tag = 'smem constant byte address 0x4 - core index']
  #allocation1 [shape = 'u32[144,128]{1,0:T(1,128)}', space=vmem, size = 0x12000, scoped, tag = 'internal scratch']
  %s0 = inlined_call_operand.hbm [shape: f32[8,32], index: 0, kind: input, shape index: {}]
  %s1 = inlined_call_operand.hbm [shape: f32[32,96], index: 1, kind: input, shape index: {}]
  %s2 = inlined_call_operand.vmem [shape: f32[1,96], index: 2, kind: input, shape index: {}]
  %s3 = inlined_call_operand.hbm [shape: f32[8,96], index: 3, kind: output, shape index: {}]
  %s4 = sld [smem:[#allocation0]]
  $region30: #{tpu_custom_call.1} parent=0
    _
  %s6 = ssub.s32 1, %s4
  %s7 = scalar_select 0, %s6, %s4
  $region1: #{tpu_custom_call.1} parent=0
    #allocation2 [shape = 'u8[4096]{0}', space=vmem, size = 0x1000, scoped, tag = 'input window, operand 0, single buffered']
    #allocation3 [shape = 's32[1]{0}', space=sflag, size = 0x4, scoped, tag = 'scoped memory for tpu_custom_call.1']
    #allocation4 [shape = 's32[1]{0}', space=sflag, size = 0x4, scoped, tag = 'scoped memory for tpu_custom_call.1']
    #allocation5 [shape = 'u8[16384]{0}', space=vmem, size = 0x4000, scoped, tag = 'input window, operand 1, single buffered']
    #allocation6 [shape = 's32[1]{0}', space=sflag, size = 0x4, scoped, tag = 'scoped memory for tpu_custom_call.1']
    #allocation7 [shape = 'u8[4096]{0}', space=vmem, size = 0x1000, scoped, tag = 'output window, operand 0, single buffered']
    %8 = vsyncpa [#allocation3], 0
    %9 = vsyncpa [#allocation6], 0
    %10 = vsyncpa [#allocation4], 0
    // Predicated region
    $region2: #{tpu_custom_call.1} parent=1 // pred_check
      _
    $region3: #{tpu_custom_call.1} parent=1 // pred_check_branch
      %12 = sbr.rel (0) target = $region5
    $region4: #{tpu_custom_call.1} parent=1 // pred_region
      %s14 = ssub.s32 128, 128
      %15 = vsyncadd [#allocation3], %s14
      %s17 = sshll.u32 [#allocation2], 4
      %s18 = int_to_ptr.vmem [resolvable:$true] %s17
      %20 = dma.hbm_to_vmem [thread:$0]  %s0, 128, %s18, [#allocation3]
    $region5: #{tpu_custom_call.1} parent=1 // pred_fallthru
      _
    // Predicated region
    $region6: #{tpu_custom_call.1} parent=1 // pred_check
      _
    $region7: #{tpu_custom_call.1} parent=1 // pred_check_branch
      %22 = sbr.rel (0) target = $region9
    $region8: #{tpu_custom_call.1} parent=1 // pred_region
      %s24 = ssub.s32 512, 512
      %25 = vsyncadd [#allocation6], %s24
      %s26 = sshll.u32 [#allocation5], 4
      %s27 = int_to_ptr.vmem [resolvable:$true] %s26
      %32 = dma.hbm_to_vmem [thread:$0]  %s1, 512, %s27, [#allocation6], 128, 128, 8
    $region9: #{tpu_custom_call.1} parent=1 // pred_fallthru
      _
    // Predicated region
    $region10: #{tpu_custom_call.1} parent=1 // pred_check
      _
    $region11: #{tpu_custom_call.1} parent=1 // pred_check_branch
      %34 = sbr.rel (0) target = $region13
    $region12: #{tpu_custom_call.1} parent=1 // pred_region
      _
    $region13: #{tpu_custom_call.1} parent=1 // pred_fallthru
      _
    // Predicated region
    $region14: #{tpu_custom_call.1} parent=1 // pred_check
      _
    $region15: #{tpu_custom_call.1} parent=1 // pred_check_branch
      %36 = sbr.rel (0) target = $region17
    $region16: #{tpu_custom_call.1} parent=1 // pred_region
      %37 = dma.done [#allocation3], 128
    $region17: #{tpu_custom_call.1} parent=1 // pred_fallthru
      _
    // Predicated region
    $region18: #{tpu_custom_call.1} parent=1 // pred_check
      _
    $region19: #{tpu_custom_call.1} parent=1 // pred_check_branch
      %39 = sbr.rel (0) target = $region21
    $region20: #{tpu_custom_call.1} parent=1 // pred_region
      %40 = dma.done [#allocation6], 512
    $region21: #{tpu_custom_call.1} parent=1 // pred_fallthru
      _
    %v41 = vld [vmem:[#allocation2] sm:$0xff]
    %v42 = vld [vmem:[#allocation5] sm:$0xff]
    %v43 = vld [vmem:[#allocation5 + $0x8] sm:$0xff]
    %v44 = vld [vmem:[#allocation5 + $0x10] sm:$0xff]
    %v45 = vld [vmem:[#allocation5 + $0x18] sm:$0xff]
    %v46 = vld [vmem:[%s2] sm:$0x1]
    %v48 = vlaneseq
    %v49 = vshrl.u32 %v48, 7
    %v50 = vsub.s32 0, %v49
    %v51 = vrot.slane %v46, %v50
    %vm53 = vcmask 261120
    %v55 = vsel %vm53, %v41, 0
    %57 = vmatprep.subr.mxu0 0.0
    %58 = vmatpush1.msra.mxu0 0.0
    %59 = vmatprep.subr.mxu0 0.0
    %60 = vmatpush1.msra.mxu0 0.0
    %61 = vmatprep.subr.mxu0 0.0
    %62 = vmatpush1.msra.mxu0 0.0
    %63 = vmatprep.subr.mxu0 0.0
    %64 = vmatpush1.msra.mxu0 0.0
    %65 = vmatprep.subr.mxu0 0.0
    %66 = vmatpush1.msra.mxu0 0.0
    %67 = vmatprep.subr.mxu0 0.0
    %68 = vmatpush1.msra.mxu0 0.0
    %69 = vmatprep.subr.mxu0 0.0
    %70 = vmatpush1.msra.mxu0 0.0
    %71 = vmatprep.subr.mxu0 0.0
    %72 = vmatpush1.msra.mxu0 0.0
    %73 = vmatprep.subr.mxu0 0.0
    %74 = vmatpush1.msra.mxu0 0.0
    %75 = vmatprep.subr.mxu0 0.0
    %76 = vmatpush1.msra.mxu0 0.0
    %77 = vmatprep.subr.mxu0 0.0
    %78 = vmatpush1.msra.mxu0 0.0
    %79 = vmatprep.subr.mxu0 0.0
    %80 = vmatpush1.msra.mxu0 0.0
    %81 = vmatprep.subr.mxu0 0.0
    %82 = vmatpush1.msra.mxu0 %v45
    %83 = vmatprep.subr.mxu0 0.0
    %84 = vmatpush1.msra.mxu0 %v44
    %85 = vmatprep.subr.mxu0 0.0
    %86 = vmatpush1.msra.mxu0 %v43
    %87 = vmatprep.subr.mxu0 0.0
    %88 = vmatpush1.msra.mxu0 %v42
    %89 = vmatprep.subr.mxu0 0.0
    %90 = vmatpush2.msra.mxu0 0.0
    %91 = vmatprep.subr.mxu0 0.0
    %92 = vmatpush2.msra.mxu0 0.0
    %93 = vmatprep.subr.mxu0 0.0
    %94 = vmatpush2.msra.mxu0 0.0
    %95 = vmatprep.subr.mxu0 0.0
    %96 = vmatpush2.msra.mxu0 0.0
    %97 = vmatprep.subr.mxu0 0.0
    %98 = vmatpush2.msra.mxu0 0.0
    %99 = vmatprep.subr.mxu0 0.0
    %100 = vmatpush2.msra.mxu0 0.0
    %101 = vmatprep.subr.mxu0 0.0
    %102 = vmatpush2.msra.mxu0 0.0
    %103 = vmatprep.subr.mxu0 0.0
    %104 = vmatpush2.msra.mxu0 0.0
    %105 = vmatprep.subr.mxu0 0.0
    %106 = vmatpush2.msra.mxu0 0.0
    %107 = vmatprep.subr.mxu0 0.0
    %108 = vmatpush2.msra.mxu0 0.0
    %109 = vmatprep.subr.mxu0 0.0
    %110 = vmatpush2.msra.mxu0 0.0
    %111 = vmatprep.subr.mxu0 0.0
    %112 = vmatpush2.msra.mxu0 0.0
    %113 = vmatprep.subr.mxu0 0.0
    %114 = vmatpush2.msra.mxu0 0.0
    %115 = vmatprep.subr.mxu0 0.0
    %116 = vmatpush2.msra.mxu0 0.0
    %117 = vmatprep.subr.mxu0 0.0
    %118 = vmatpush2.msra.mxu0 0.0
    %119 = vmatprep.subr.mxu0 0.0
    %120 = vmatpush2.msra.mxu0 0.0
    %121 = vmatprep.mubr.f32.mxu0 0.0
    %122 = vmatmul.mubr.f32.gmra.mxu0 %v55
    %v123 = vpop.f32.mrf.mxu0
    %v124 = vadd.f32 %v51, %v123
    %v125 = vpop.f32.mrf.mxu0
    %126 = vdwg.mxu0
    %vm127 = vcmask 785408
    %128 = vst.msk [vmem:[#allocation7] sm:$0xff] %vm127, %v124
    // Predicated region
    $region22: #{tpu_custom_call.1} parent=1 // pred_check
      _
    $region23: #{tpu_custom_call.1} parent=1 // pred_check_branch
      %130 = sbr.rel (0) target = $region25
    $region24: #{tpu_custom_call.1} parent=1 // pred_region
      %s132 = ssub.s32 128, 128
      %133 = vsyncadd [#allocation4], %s132
      %s135 = sshll.u32 [#allocation7], 4
      %s136 = int_to_ptr.vmem [resolvable:$true] %s135
      %138 = dma.vmem_to_hbm [thread:$0]  %s136, 128, %s3, [#allocation4]
    $region25: #{tpu_custom_call.1} parent=1 // pred_fallthru
      _
    // Predicated region
    $region26: #{tpu_custom_call.1} parent=1 // pred_check
      _
    $region27: #{tpu_custom_call.1} parent=1 // pred_check_branch
      %140 = sbr.rel (0) target = $region29
    $region28: #{tpu_custom_call.1} parent=1 // pred_region
      %141 = dma.done [#allocation4], 128
    $region29: #{tpu_custom_call.1} parent=1 // pred_fallthru
      _
    %142 = vsyncpa [#allocation3], 1
    %143 = vsyncpa [#allocation6], 1
    %144 = vsyncpa [#allocation4], 1

</llo_original>
